<compile_context>
chip_gen: v6e
topology: v6e:2x2x1
jax: 0.10.0
libtpu: 0.0.40
codegen_flags: <defaults>
</compile_context>

<pallas_src>
import jax
import jax.numpy as jnp
import numpy as np
from jax.experimental import pallas as pl
from jax.experimental.pallas import tpu as pltpu

LANE = 128


def _round_up(x, m):
    return ((x + m - 1) // m) * m


# ----------------------------- Pallas kernel -------------------------------

def actor_kernel(x_ref,
                 w01_ref, b01_ref,     # fused fc0+fc1: state_dim -> 256
                 w12_ref, b12_ref,     # 256 -> 256
                 w13_ref, b13_ref,     # 256 -> 256
                 w2_ref, b2_ref,       # 256 -> 64
                 w3_ref, b3_ref,       # 64  -> action_dim (lane-padded to 128)
                 out_ref):
    """Whole Actor forward (4 hidden matmuls + logits + softmax) on one batch tile."""
    act = jnp.tanh  # args.use_tanh = 1 -> nn.Tanh()

    x = x_ref[...]
    # act(fc1(fc0(x))) with fc0/fc1 fused into a single linear layer.
    h = act(jnp.dot(x, w01_ref[...], preferred_element_type=jnp.float32) + b01_ref[...])
    # fc12
    h = act(jnp.dot(h, w12_ref[...], preferred_element_type=jnp.float32) + b12_ref[...])
    # fc13
    h = act(jnp.dot(h, w13_ref[...], preferred_element_type=jnp.float32) + b13_ref[...])
    # fc2
    h = act(jnp.dot(h, w2_ref[...], preferred_element_type=jnp.float32) + b2_ref[...])
    # fc3 -> logits over the lane-padded action dim.  Pad columns carry a
    # -1e30 bias (set host-side) so they contribute exp(.) == 0 to the softmax.
    logits = jnp.dot(h, w3_ref[...], preferred_element_type=jnp.float32) + b3_ref[...]
    m = jnp.max(logits, axis=-1, keepdims=True)
    e = jnp.exp(logits - m)
    denom = jnp.sum(e, axis=-1, keepdims=True)
    # Exact normalization (approx reciprocal broke the sum-to-one property).
    out_ref[...] = e / denom


# ------------------------------ Host wrapper --------------------------------

def actor_forward(x, params, *, batch_tile=256):
    """x: (B, state_dim) float32; params: dict of (w, b) per layer.

    Returns (B, action_dim) softmax probabilities.
    """
    x = jnp.asarray(x, jnp.float32)
    B, state_dim = x.shape
    action_dim = params["w3"].shape[1]
    a_pad = _round_up(action_dim, LANE)

    # ---- host-side parameter prep (cheap, shapes are tiny) ----
    # Fuse fc0 + fc1 (no nonlinearity between them): one matmul in the kernel.
    w01 = (params["w0"] @ params["w1"]).astype(jnp.float32)          # (state_dim, 256)
    b01 = (params["b0"] @ params["w1"] + params["b1"]).astype(jnp.float32)  # (1, 256)
    # Lane-pad the last layer: extra weight columns are 0, extra bias entries
    # are a large negative so softmax over the padded lanes is exact.
    w3p = jnp.zeros((params["w3"].shape[0], a_pad), jnp.float32)
    w3p = w3p.at[:, :action_dim].set(params["w3"])
    b3p = jnp.full((1, a_pad), -1e30, jnp.float32)
    b3p = b3p.at[:, :action_dim].set(params["b3"][0])

    flat_params = [
        w01, b01,
        params["w12"], params["b12"],
        params["w13"], params["b13"],
        params["w2"], params["b2"],
        w3p, b3p,
    ]

    # ---- batch tiling: big tiles for MXU occupancy, padded last tile ----
    tile = min(batch_tile, max(8, _round_up(B, 8)))
    tile = _round_up(tile, 8)
    B_pad = _round_up(B, tile)
    if B_pad != B:
        x = jnp.pad(x, ((0, B_pad - B), (0, 0)))
    grid = (pl.cdiv(B_pad, tile),)

    def full_spec(shape):
        # whole (tiny) parameter resident in VMEM; constant block index so it
        # is not re-fetched across grid steps.
        return pl.BlockSpec(shape, lambda i, _s=len(shape): (0,) * _s)

    in_specs = [pl.BlockSpec((tile, state_dim), lambda i: (i, 0))]
    in_specs += [full_spec(p.shape) for p in flat_params]
    out_spec = pl.BlockSpec((tile, a_pad), lambda i: (i, 0))

    out = pl.pallas_call(
        actor_kernel,
        out_shape=jax.ShapeDtypeStruct((B_pad, a_pad), jnp.float32),
        grid_spec=pltpu.PrefetchScalarGridSpec(
            num_scalar_prefetch=0,
            grid=grid,
            in_specs=in_specs,
            out_specs=out_spec,
        ),
        compiler_params=pltpu.CompilerParams(
            dimension_semantics=("parallel",),
        ),
    )(x, *flat_params)

    return out[:B, :action_dim]


# --------------------------- Parameter creation ------------------------------

def _orthogonal(key, out_dim, in_dim, gain=1.0):
    """Mimic torch.nn.init.orthogonal_ for a (out_dim, in_dim) weight; return
    its transpose (in_dim, out_dim) for x @ W layout."""
    rows, cols = out_dim, in_dim
    big, small = max(rows, cols), min(rows, cols)
    a = jax.random.normal(key, (big, small), dtype=jnp.float32)
    q, r = jnp.linalg.qr(a)
    q = q * jnp.sign(jnp.diag(r))           # sign correction
    if rows < cols:
        q = q.T
    w = gain * q[:rows, :cols]              # (out, in)
    return w.T                              # (in, out)


def _default_linear(key, in_dim, out_dim):
    """torch default nn.Linear init: U(-1/sqrt(in), 1/sqrt(in))."""
    kw, kb = jax.random.split(key)
    bound = 1.0 / np.sqrt(in_dim)
    w = jax.random.uniform(kw, (in_dim, out_dim), jnp.float32, -bound, bound)
    b = jax.random.uniform(kb, (1, out_dim), jnp.float32, -bound, bound)
    return w, b


def make_params(key, state_dim, action_dim):
    ks = jax.random.split(key, 8)
    w0, b0 = _default_linear(ks[0], state_dim, 512)     # FeatureExtractor (assumed Linear)
    params = {
        "w0": w0, "b0": b0,
        # use_orthogonal_init = True -> orthogonal weights, zero bias
        "w1":  _orthogonal(ks[1], 256, 512),        "b1":  jnp.zeros((1, 256), jnp.float32),
        "w12": _orthogonal(ks[2], 256, 256),        "b12": jnp.zeros((1, 256), jnp.float32),
        "w13": _orthogonal(ks[3], 256, 256),        "b13": jnp.zeros((1, 256), jnp.float32),
        "w2":  _orthogonal(ks[4], 64, 256),         "b2":  jnp.zeros((1, 64), jnp.float32),
        "w3":  _orthogonal(ks[5], action_dim, 64, gain=0.01),
        "b3":  jnp.zeros((1, action_dim), jnp.float32),
    }
    return params


def actor_reference(x, p):
    """Pure-JAX reference (unfused, exactly the PyTorch forward)."""
    act = jnp.tanh
    h = x @ p["w0"] + p["b0"]
    h = act(h @ p["w1"] + p["b1"])
    h = act(h @ p["w12"] + p["b12"])
    h = act(h @ p["w13"] + p["b13"])
    h = act(h @ p["w2"] + p["b2"])
    logits = h @ p["w3"] + p["b3"]
    return jax.nn.softmax(logits, axis=1)


# ---------------------------------- Main -------------------------------------

if __name__ == "__main__":
    B, STATE_DIM, ACTION_DIM = 8, 16, 8

    key = jax.random.PRNGKey(0)
    k_params, k_x = jax.random.split(key)
    params = make_params(k_params, STATE_DIM, ACTION_DIM)
    x = jax.random.normal(k_x, (B, STATE_DIM), dtype=jnp.float32)

    a_prob = actor_forward(x, params)
    a_prob = jax.block_until_ready(a_prob)

    ref = actor_reference(x, params)
    # Tolerance accounts for the fused fc0/fc1 matmul reassociation.
    np.testing.assert_allclose(np.asarray(a_prob), np.asarray(ref),
                               rtol=2e-3, atol=2e-4)
    # each row of a_prob must sum to 1 (softmax over dim=1)
    np.testing.assert_allclose(np.asarray(a_prob).sum(axis=1),
                               np.ones(B), rtol=0, atol=1e-3)
    assert a_prob.shape == (B, ACTION_DIM)

    print("KERNEL_OK")
</pallas_src>

<mosaic_0001>
module attributes {stable_mosaic.version = 11 : i64} {
  func.func @actor_kernel(%arg0: i32, %arg1: memref<8x16xf32, #tpu.memory_space<vmem>>, %arg2: memref<16x256xf32, #tpu.memory_space<vmem>>, %arg3: memref<1x256xf32, #tpu.memory_space<vmem>>, %arg4: memref<256x256xf32, #tpu.memory_space<vmem>>, %arg5: memref<1x256xf32, #tpu.memory_space<vmem>>, %arg6: memref<256x256xf32, #tpu.memory_space<vmem>>, %arg7: memref<1x256xf32, #tpu.memory_space<vmem>>, %arg8: memref<256x64xf32, #tpu.memory_space<vmem>>, %arg9: memref<1x64xf32, #tpu.memory_space<vmem>>, %arg10: memref<64x128xf32, #tpu.memory_space<vmem>>, %arg11: memref<1x128xf32, #tpu.memory_space<vmem>>, %arg12: memref<8x128xf32, #tpu.memory_space<vmem>>) attributes {dimension_semantics = [#tpu.dimension_semantics<parallel>], iteration_bounds = array<i64: 1>, scalar_prefetch = 0 : i64, scratch_operands = 0 : i64, tpu.core_type = #tpu.core_type<tc>, window_params = [{transform_indices = @transform_0, window_bounds = array<i64: 8, 16>}, {pipeline_mode = #tpu.pipeline_mode<synchronous>, transform_indices = @transform_1, window_bounds = array<i64: 16, 256>}, {pipeline_mode = #tpu.pipeline_mode<synchronous>, transform_indices = @transform_2, window_bounds = array<i64: 1, 256>}, {pipeline_mode = #tpu.pipeline_mode<synchronous>, transform_indices = @transform_3, window_bounds = array<i64: 256, 256>}, {pipeline_mode = #tpu.pipeline_mode<synchronous>, transform_indices = @transform_4, window_bounds = array<i64: 1, 256>}, {pipeline_mode = #tpu.pipeline_mode<synchronous>, transform_indices = @transform_5, window_bounds = array<i64: 256, 256>}, {pipeline_mode = #tpu.pipeline_mode<synchronous>, transform_indices = @transform_6, window_bounds = array<i64: 1, 256>}, {pipeline_mode = #tpu.pipeline_mode<synchronous>, transform_indices = @transform_7, window_bounds = array<i64: 256, 64>}, {pipeline_mode = #tpu.pipeline_mode<synchronous>, transform_indices = @transform_8, window_bounds = array<i64: 1, 64>}, {pipeline_mode = #tpu.pipeline_mode<synchronous>, transform_indices = @transform_9, window_bounds = array<i64: 64, 128>}, {pipeline_mode = #tpu.pipeline_mode<synchronous>, transform_indices = @transform_10, window_bounds = array<i64: 1, 128>}, {transform_indices = @transform_11, window_bounds = array<i64: 8, 128>}]} {
    %c0 = arith.constant 0 : index
    %c0_0 = arith.constant 0 : index
    %0 = vector.load %arg1[%c0, %c0_0] : memref<8x16xf32, #tpu.memory_space<vmem>>, vector<8x16xf32>
    %c0_1 = arith.constant 0 : index
    %c0_2 = arith.constant 0 : index
    %1 = vector.load %arg2[%c0_1, %c0_2] : memref<16x256xf32, #tpu.memory_space<vmem>>, vector<16x256xf32>
    %cst = arith.constant dense<0.000000e+00> : vector<8x256xf32>
    %2 = tpu.matmul %0, %1, %cst {dimension_numbers = #tpu.dot_dimension_numbers<[1], [0], [0], [1], [0, 0, 1, 1], [], []>} : vector<8x16xf32>, vector<16x256xf32>, vector<8x256xf32> -> vector<8x256xf32>
    %c0_3 = arith.constant 0 : index
    %c0_4 = arith.constant 0 : index
    %3 = vector.load %arg3[%c0_3, %c0_4] : memref<1x256xf32, #tpu.memory_space<vmem>>, vector<1x256xf32>
    %4 = vector.broadcast %3 : vector<1x256xf32> to vector<8x256xf32>
    %5 = arith.addf %2, %4 : vector<8x256xf32>
    %6 = math.tanh %5 : vector<8x256xf32>
    %c0_5 = arith.constant 0 : index
    %c0_6 = arith.constant 0 : index
    %7 = vector.load %arg4[%c0_5, %c0_6] : memref<256x256xf32, #tpu.memory_space<vmem>>, vector<256x256xf32>
    %cst_7 = arith.constant dense<0.000000e+00> : vector<8x256xf32>
    %8 = tpu.matmul %6, %7, %cst_7 {dimension_numbers = #tpu.dot_dimension_numbers<[1], [0], [0], [1], [0, 0, 1, 1], [], []>} : vector<8x256xf32>, vector<256x256xf32>, vector<8x256xf32> -> vector<8x256xf32>
    %c0_8 = arith.constant 0 : index
    %c0_9 = arith.constant 0 : index
    %9 = vector.load %arg5[%c0_8, %c0_9] : memref<1x256xf32, #tpu.memory_space<vmem>>, vector<1x256xf32>
    %10 = vector.broadcast %9 : vector<1x256xf32> to vector<8x256xf32>
    %11 = arith.addf %8, %10 : vector<8x256xf32>
    %12 = math.tanh %11 : vector<8x256xf32>
    %c0_10 = arith.constant 0 : index
    %c0_11 = arith.constant 0 : index
    %13 = vector.load %arg6[%c0_10, %c0_11] : memref<256x256xf32, #tpu.memory_space<vmem>>, vector<256x256xf32>
    %cst_12 = arith.constant dense<0.000000e+00> : vector<8x256xf32>
    %14 = tpu.matmul %12, %13, %cst_12 {dimension_numbers = #tpu.dot_dimension_numbers<[1], [0], [0], [1], [0, 0, 1, 1], [], []>} : vector<8x256xf32>, vector<256x256xf32>, vector<8x256xf32> -> vector<8x256xf32>
    %c0_13 = arith.constant 0 : index
    %c0_14 = arith.constant 0 : index
    %15 = vector.load %arg7[%c0_13, %c0_14] : memref<1x256xf32, #tpu.memory_space<vmem>>, vector<1x256xf32>
    %16 = vector.broadcast %15 : vector<1x256xf32> to vector<8x256xf32>
    %17 = arith.addf %14, %16 : vector<8x256xf32>
    %18 = math.tanh %17 : vector<8x256xf32>
    %c0_15 = arith.constant 0 : index
    %c0_16 = arith.constant 0 : index
    %19 = vector.load %arg8[%c0_15, %c0_16] : memref<256x64xf32, #tpu.memory_space<vmem>>, vector<256x64xf32>
    %cst_17 = arith.constant dense<0.000000e+00> : vector<8x64xf32>
    %20 = tpu.matmul %18, %19, %cst_17 {dimension_numbers = #tpu.dot_dimension_numbers<[1], [0], [0], [1], [0, 0, 1, 1], [], []>} : vector<8x256xf32>, vector<256x64xf32>, vector<8x64xf32> -> vector<8x64xf32>
    %c0_18 = arith.constant 0 : index
    %c0_19 = arith.constant 0 : index
    %21 = vector.load %arg9[%c0_18, %c0_19] : memref<1x64xf32, #tpu.memory_space<vmem>>, vector<1x64xf32>
    %22 = vector.broadcast %21 : vector<1x64xf32> to vector<8x64xf32>
    %23 = arith.addf %20, %22 : vector<8x64xf32>
    %24 = math.tanh %23 : vector<8x64xf32>
    %c0_20 = arith.constant 0 : index
    %c0_21 = arith.constant 0 : index
    %25 = vector.load %arg10[%c0_20, %c0_21] : memref<64x128xf32, #tpu.memory_space<vmem>>, vector<64x128xf32>
    %cst_22 = arith.constant dense<0.000000e+00> : vector<8x128xf32>
    %26 = tpu.matmul %24, %25, %cst_22 {dimension_numbers = #tpu.dot_dimension_numbers<[1], [0], [0], [1], [0, 0, 1, 1], [], []>} : vector<8x64xf32>, vector<64x128xf32>, vector<8x128xf32> -> vector<8x128xf32>
    %c0_23 = arith.constant 0 : index
    %c0_24 = arith.constant 0 : index
    %27 = vector.load %arg11[%c0_23, %c0_24] : memref<1x128xf32, #tpu.memory_space<vmem>>, vector<1x128xf32>
    %28 = vector.broadcast %27 : vector<1x128xf32> to vector<8x128xf32>
    %29 = arith.addf %26, %28 : vector<8x128xf32>
    %cst_25 = arith.constant dense<0xFF800000> : vector<8xf32>
    %30 = vector.multi_reduction <maximumf>, %29, %cst_25 [1] : vector<8x128xf32> to vector<8xf32>
    %31 = vector.shape_cast %30 : vector<8xf32> to vector<8x1xf32>
    %32 = vector.broadcast %31 : vector<8x1xf32> to vector<8x128xf32>
    %33 = arith.subf %29, %32 : vector<8x128xf32>
    %34 = math.exp %33 : vector<8x128xf32>
    %cst_26 = arith.constant dense<0.000000e+00> : vector<8xf32>
    %35 = vector.multi_reduction <add>, %34, %cst_26 [1] : vector<8x128xf32> to vector<8xf32>
    %36 = vector.shape_cast %35 : vector<8xf32> to vector<8x1xf32>
    %37 = vector.broadcast %36 : vector<8x1xf32> to vector<8x128xf32>
    %38 = arith.divf %34, %37 : vector<8x128xf32>
    %c0_27 = arith.constant 0 : index
    %c0_28 = arith.constant 0 : index
    %39 = vector.load %arg12[%c0_27, %c0_28] : memref<8x128xf32, #tpu.memory_space<vmem>>, vector<8x128xf32>
    tpu.vector_store %arg12[%c0_27, %c0_28], %38 {strides = array<i32>} : memref<8x128xf32, #tpu.memory_space<vmem>>, vector<8x128xf32>,
    return
  }
  func.func @transform_0(%arg0: i32) -> (i32, i32) {
    %c0_i32 = arith.constant 0 : i32
    %c0_i32_0 = arith.constant 0 : i32
    return %arg0, %c0_i32 : i32, i32
  }
  func.func @transform_1(%arg0: i32) -> (i32, i32) {
    %c0_i32 = arith.constant 0 : i32
    %c0_i32_0 = arith.constant 0 : i32
    %c0_i32_1 = arith.constant 0 : i32
    return %c0_i32, %c0_i32_0 : i32, i32
  }
  func.func @transform_2(%arg0: i32) -> (i32, i32) {
    %c0_i32 = arith.constant 0 : i32
    %c0_i32_0 = arith.constant 0 : i32
    %c0_i32_1 = arith.constant 0 : i32
    return %c0_i32, %c0_i32_0 : i32, i32
  }
  func.func @transform_3(%arg0: i32) -> (i32, i32) {
    %c0_i32 = arith.constant 0 : i32
    %c0_i32_0 = arith.constant 0 : i32
    %c0_i32_1 = arith.constant 0 : i32
    return %c0_i32, %c0_i32_0 : i32, i32
  }
  func.func @transform_4(%arg0: i32) -> (i32, i32) {
    %c0_i32 = arith.constant 0 : i32
    %c0_i32_0 = arith.constant 0 : i32
    %c0_i32_1 = arith.constant 0 : i32
    return %c0_i32, %c0_i32_0 : i32, i32
  }
  func.func @transform_5(%arg0: i32) -> (i32, i32) {
    %c0_i32 = arith.constant 0 : i32
    %c0_i32_0 = arith.constant 0 : i32
    %c0_i32_1 = arith.constant 0 : i32
    return %c0_i32, %c0_i32_0 : i32, i32
  }
  func.func @transform_6(%arg0: i32) -> (i32, i32) {
    %c0_i32 = arith.constant 0 : i32
    %c0_i32_0 = arith.constant 0 : i32
    %c0_i32_1 = arith.constant 0 : i32
    return %c0_i32, %c0_i32_0 : i32, i32
  }
  func.func @transform_7(%arg0: i32) -> (i32, i32) {
    %c0_i32 = arith.constant 0 : i32
    %c0_i32_0 = arith.constant 0 : i32
    %c0_i32_1 = arith.constant 0 : i32
    return %c0_i32, %c0_i32_0 : i32, i32
  }
  func.func @transform_8(%arg0: i32) -> (i32, i32) {
    %c0_i32 = arith.constant 0 : i32
    %c0_i32_0 = arith.constant 0 : i32
    %c0_i32_1 = arith.constant 0 : i32
    return %c0_i32, %c0_i32_0 : i32, i32
  }
  func.func @transform_9(%arg0: i32) -> (i32, i32) {
    %c0_i32 = arith.constant 0 : i32
    %c0_i32_0 = arith.constant 0 : i32
    %c0_i32_1 = arith.constant 0 : i32
    return %c0_i32, %c0_i32_0 : i32, i32
  }
  func.func @transform_10(%arg0: i32) -> (i32, i32) {
    %c0_i32 = arith.constant 0 : i32
    %c0_i32_0 = arith.constant 0 : i32
    %c0_i32_1 = arith.constant 0 : i32
    return %c0_i32, %c0_i32_0 : i32, i32
  }
  func.func @transform_11(%arg0: i32) -> (i32, i32) {
    %c0_i32 = arith.constant 0 : i32
    %c0_i32_0 = arith.constant 0 : i32
    return %arg0, %c0_i32 : i32, i32
  }
}

</mosaic_0001>

<llo_original>
// kernel: tpu_custom_call.1
$region0: #{tpu_custom_call.1}
  #allocation0 [shape = 'u32[]', space=smem, size = 0x4, offset = 0x4, fixed_abs, tag = 'smem constant byte address 0x4 - core index']
  #allocation1 [shape = 'u32[144,128]{1,0:T(1,128)}', space=vmem, size = 0x12000, scoped, tag = 'internal scratch']
  %s0 = inlined_call_operand.vmem [shape: f32[8,16], index: 0, kind: input, shape index: {}]
  %s1 = inlined_call_operand.vmem [shape: f32[16,256], index: 1, kind: input, shape index: {}]
  %s2 = inlined_call_operand.vmem [shape: f32[1,256], index: 2, kind: input, shape index: {}]
  %s3 = inlined_call_operand.hbm [shape: f32[256,256], index: 3, kind: input, shape index: {}]
  %s4 = inlined_call_operand.vmem [shape: f32[1,256], index: 4, kind: input, shape index: {}]
  %s5 = inlined_call_operand.hbm [shape: f32[256,256], index: 5, kind: input, shape index: {}]
  %s6 = inlined_call_operand.vmem [shape: f32[1,256], index: 6, kind: input, shape index: {}]
  %s7 = inlined_call_operand.vmem [shape: f32[256,64], index: 7, kind: input, shape index: {}]
  %s8 = inlined_call_operand.vmem [shape: f32[1,64], index: 8, kind: input, shape index: {}]
  %s9 = inlined_call_operand.vmem [shape: f32[64,128], index: 9, kind: input, shape index: {}]
  %s10 = inlined_call_operand.vmem [shape: f32[1,128], index: 10, kind: input, shape index: {}]
  %s11 = inlined_call_operand.hbm [shape: f32[8,128], index: 11, kind: output, shape index: {}]
  %s12 = sld [smem:[#allocation0]]
  $region62: #{tpu_custom_call.1} parent=0
    _
  %s14 = ssub.s32 1, %s12
  %s15 = scalar_select 0, %s14, %s12
  $region1: #{tpu_custom_call.1} parent=0
    #allocation2 [shape = 'u8[262144]{0}', space=vmem, size = 0x40000, scoped, tag = 'input window, operand 3, single buffered']
    #allocation3 [shape = 's32[1]{0}', space=sflag, size = 0x4, scoped, tag = 'scoped memory for tpu_custom_call.1']
    #allocation4 [shape = 's32[1]{0}', space=sflag, size = 0x4, scoped, tag = 'scoped memory for tpu_custom_call.1']
    #allocation5 [shape = 'u8[262144]{0}', space=vmem, size = 0x40000, scoped, tag = 'input window, operand 5, single buffered']
    #allocation6 [shape = 's32[1]{0}', space=sflag, size = 0x4, scoped, tag = 'scoped memory for tpu_custom_call.1']
    #allocation7 [shape = 'u8[4096]{0}', space=vmem, size = 0x1000, scoped, tag = 'output window, operand 0, single buffered']
    %16 = vsyncpa [#allocation3], 0
    %17 = vsyncpa [#allocation6], 0
    %18 = vsyncpa [#allocation4], 0
    // Predicated region
    $region2: #{tpu_custom_call.1} parent=1 // pred_check
      _
    $region3: #{tpu_custom_call.1} parent=1 // pred_check_branch
      %20 = sbr.rel (0) target = $region5
    $region4: #{tpu_custom_call.1} parent=1 // pred_region
      _
    $region5: #{tpu_custom_call.1} parent=1 // pred_fallthru
      _
    // Predicated region
    $region6: #{tpu_custom_call.1} parent=1 // pred_check
      _
    $region7: #{tpu_custom_call.1} parent=1 // pred_check_branch
      %22 = sbr.rel (0) target = $region9
    $region8: #{tpu_custom_call.1} parent=1 // pred_region
      _
    $region9: #{tpu_custom_call.1} parent=1 // pred_fallthru
      _
    // Predicated region
    $region10: #{tpu_custom_call.1} parent=1 // pred_check
      _
    $region11: #{tpu_custom_call.1} parent=1 // pred_check_branch
      %24 = sbr.rel (0) target = $region13
    $region12: #{tpu_custom_call.1} parent=1 // pred_region
      _
    $region13: #{tpu_custom_call.1} parent=1 // pred_fallthru
      _
    // Predicated region
    $region14: #{tpu_custom_call.1} parent=1 // pred_check
      _
    $region15: #{tpu_custom_call.1} parent=1 // pred_check_branch
      %26 = sbr.rel (0) target = $region17
    $region16: #{tpu_custom_call.1} parent=1 // pred_region
      %s28 = ssub.s32 8192, 8192
      %29 = vsyncadd [#allocation3], %s28
      %s30 = sshll.u32 [#allocation2], 4
      %s31 = int_to_ptr.vmem [resolvable:$true] %s30
      %36 = dma.hbm_to_vmem [thread:$0]  %s3, 8192, %s31, [#allocation3], 256, 256, 16
    $region17: #{tpu_custom_call.1} parent=1 // pred_fallthru
      _
    // Predicated region
    $region18: #{tpu_custom_call.1} parent=1 // pred_check
      _
    $region19: #{tpu_custom_call.1} parent=1 // pred_check_branch
      %38 = sbr.rel (0) target = $region21
    $region20: #{tpu_custom_call.1} parent=1 // pred_region
      _
    $region21: #{tpu_custom_call.1} parent=1 // pred_fallthru
      _
    // Predicated region
    $region22: #{tpu_custom_call.1} parent=1 // pred_check
      _
    $region23: #{tpu_custom_call.1} parent=1 // pred_check_branch
      %40 = sbr.rel (0) target = $region25
    $region24: #{tpu_custom_call.1} parent=1 // pred_region
      %s42 = ssub.s32 8192, 8192
      %43 = vsyncadd [#allocation6], %s42
      %s44 = sshll.u32 [#allocation5], 4
      %s45 = int_to_ptr.vmem [resolvable:$true] %s44
      %50 = dma.hbm_to_vmem [thread:$0]  %s5, 8192, %s45, [#allocation6], 256, 256, 16
    $region25: #{tpu_custom_call.1} parent=1 // pred_fallthru
      _
    // Predicated region
    $region26: #{tpu_custom_call.1} parent=1 // pred_check
      _
    $region27: #{tpu_custom_call.1} parent=1 // pred_check_branch
      %52 = sbr.rel (0) target = $region29
    $region28: #{tpu_custom_call.1} parent=1 // pred_region
      _
    $region29: #{tpu_custom_call.1} parent=1 // pred_fallthru
      _
    // Predicated region
    $region30: #{tpu_custom_call.1} parent=1 // pred_check
      _
    $region31: #{tpu_custom_call.1} parent=1 // pred_check_branch
      %54 = sbr.rel (0) target = $region33
    $region32: #{tpu_custom_call.1} parent=1 // pred_region
      _
    $region33: #{tpu_custom_call.1} parent=1 // pred_fallthru
      _
    // Predicated region
    $region34: #{tpu_custom_call.1} parent=1 // pred_check
      _
    $region35: #{tpu_custom_call.1} parent=1 // pred_check_branch
      %56 = sbr.rel (0) target = $region37
    $region36: #{tpu_custom_call.1} parent=1 // pred_region
      _
    $region37: #{tpu_custom_call.1} parent=1 // pred_fallthru
      _
    // Predicated region
    $region38: #{tpu_custom_call.1} parent=1 // pred_check
      _
    $region39: #{tpu_custom_call.1} parent=1 // pred_check_branch
      %58 = sbr.rel (0) target = $region41
    $region40: #{tpu_custom_call.1} parent=1 // pred_region
      _
    $region41: #{tpu_custom_call.1} parent=1 // pred_fallthru
      _
    // Predicated region
    $region42: #{tpu_custom_call.1} parent=1 // pred_check
      _
    $region43: #{tpu_custom_call.1} parent=1 // pred_check_branch
      %60 = sbr.rel (0) target = $region45
    $region44: #{tpu_custom_call.1} parent=1 // pred_region
      _
    $region45: #{tpu_custom_call.1} parent=1 // pred_fallthru
      _
    // Predicated region
    $region46: #{tpu_custom_call.1} parent=1 // pred_check
      _
    $region47: #{tpu_custom_call.1} parent=1 // pred_check_branch
      %62 = sbr.rel (0) target = $region49
    $region48: #{tpu_custom_call.1} parent=1 // pred_region
      %63 = dma.done [#allocation3], 8192
    $region49: #{tpu_custom_call.1} parent=1 // pred_fallthru
      _
    // Predicated region
    $region50: #{tpu_custom_call.1} parent=1 // pred_check
      _
    $region51: #{tpu_custom_call.1} parent=1 // pred_check_branch
      %65 = sbr.rel (0) target = $region53
    $region52: #{tpu_custom_call.1} parent=1 // pred_region
      %66 = dma.done [#allocation6], 8192
    $region53: #{tpu_custom_call.1} parent=1 // pred_fallthru
      _
    %v67 = vld [vmem:[%s0] sm:$0xff]
    %v68 = vld [vmem:[%s1] sm:$0xff]
    %v69 = vld [vmem:[%s1 + $0x8] sm:$0xff]
    %v70 = vld [vmem:[%s1 + $0x10] sm:$0xff]
    %v71 = vld [vmem:[%s1 + $0x18] sm:$0xff]
    %v72 = vld [vmem:[%s2] sm:$0x3]
    %v74 = vlaneseq
    %v75 = vshrl.u32 %v74, 7
    %v76 = vsub.s32 0, %v75
    %v77 = vrot.slane %v72, %v76
    %v78 = vlaneseq
    %v79 = vshrl.u32 %v78, 7
    %v80 = vsub.s32 1, %v79
    %v81 = vrot.slane %v72, %v80
    %vm84 = vcmask 130048
    %v86 = vsel %vm84, %v67, 0
    %88 = vmatprep.subr.mxu0 0.0
    %89 = vmatpush1.msra.mxu0 0.0
    %90 = vmatprep.subr.mxu0 0.0
    %91 = vmatpush1.msra.mxu0 0.0
    %92 = vmatprep.subr.mxu0 0.0
    %93 = vmatpush1.msra.mxu0 0.0
    %94 = vmatprep.subr.mxu0 0.0
    %95 = vmatpush1.msra.mxu0 0.0
    %96 = vmatprep.subr.mxu0 0.0
    %97 = vmatpush1.msra.mxu0 0.0
    %98 = vmatprep.subr.mxu0 0.0
    %99 = vmatpush1.msra.mxu0 0.0
    %100 = vmatprep.subr.mxu0 0.0
    %101 = vmatpush1.msra.mxu0 0.0
    %102 = vmatprep.subr.mxu0 0.0
    %103 = vmatpush1.msra.mxu0 0.0
    %104 = vmatprep.subr.mxu0 0.0
    %105 = vmatpush1.msra.mxu0 0.0
    %106 = vmatprep.subr.mxu0 0.0
    %107 = vmatpush1.msra.mxu0 0.0
    %108 = vmatprep.subr.mxu0 0.0
    %109 = vmatpush1.msra.mxu0 0.0
    %110 = vmatprep.subr.mxu0 0.0
    %111 = vmatpush1.msra.mxu0 0.0
    %112 = vmatprep.subr.mxu0 0.0
    %113 = vmatpush1.msra.mxu0 0.0
    %114 = vmatprep.subr.mxu0 0.0
    %115 = vmatpush1.msra.mxu0 0.0
    %116 = vmatprep.subr.mxu0 %v71
    %117 = vmatpush1.msra.mxu0 %v70
    %118 = vmatprep.subr.mxu0 %v69
    %119 = vmatpush1.msra.mxu0 %v68
    %120 = vmatprep.subr.mxu0 0.0
    %121 = vmatpush2.msra.mxu0 0.0
    %122 = vmatprep.subr.mxu0 0.0
    %123 = vmatpush2.msra.mxu0 0.0
    %124 = vmatprep.subr.mxu0 0.0
    %125 = vmatpush2.msra.mxu0 0.0
    %126 = vmatprep.subr.mxu0 0.0
    %127 = vmatpush2.msra.mxu0 0.0
    %128 = vmatprep.subr.mxu0 0.0
    %129 = vmatpush2.msra.mxu0 0.0
    %130 = vmatprep.subr.mxu0 0.0
    %131 = vmatpush2.msra.mxu0 0.0
    %132 = vmatprep.subr.mxu0 0.0
    %133 = vmatpush2.msra.mxu0 0.0
    %134 = vmatprep.subr.mxu0 0.0
    %135 = vmatpush2.msra.mxu0 0.0
    %136 = vmatprep.subr.mxu0 0.0
    %137 = vmatpush2.msra.mxu0 0.0
    %138 = vmatprep.subr.mxu0 0.0
    %139 = vmatpush2.msra.mxu0 0.0
    %140 = vmatprep.subr.mxu0 0.0
    %141 = vmatpush2.msra.mxu0 0.0
    %142 = vmatprep.subr.mxu0 0.0
    %143 = vmatpush2.msra.mxu0 0.0
    %144 = vmatprep.subr.mxu0 0.0
    %145 = vmatpush2.msra.mxu0 0.0
    %146 = vmatprep.subr.mxu0 0.0
    %147 = vmatpush2.msra.mxu0 0.0
    %148 = vmatprep.subr.mxu0 0.0
    %149 = vmatpush2.msra.mxu0 0.0
    %150 = vmatprep.subr.mxu0 0.0
    %151 = vmatpush2.msra.mxu0 0.0
    %152 = vmatprep.mubr.f32.mxu0 0.0
    %153 = vmatmul.mubr.f32.gmra.mxu0 %v86
    %v154 = vpop.f32.mrf.mxu0
    %v155 = vadd.f32 %v77, %v154
    %v156 = vpop.f32.mrf.mxu0
    %v157 = vadd.f32 %v81, %v156
    %158 = vdwg.mxu0
    %v159 = vtanh.pop %v155
    %v160 = vtanh.pop %v157
    %v161 = vld [vmem:[#allocation2] sm:$0xff]
    %v162 = vld [vmem:[#allocation2 + $0x8] sm:$0xff]
    %v163 = vld [vmem:[#allocation2 + $0x10] sm:$0xff]
    %v164 = vld [vmem:[#allocation2 + $0x18] sm:$0xff]
    %v165 = vld [vmem:[#allocation2 + $0x20] sm:$0xff]
    %v166 = vld [vmem:[#allocation2 + $0x28] sm:$0xff]
    %v167 = vld [vmem:[#allocation2 + $0x30] sm:$0xff]
    %v168 = vld [vmem:[#allocation2 + $0x38] sm:$0xff]
    %v169 = vld [vmem:[#allocation2 + $0x40] sm:$0xff]
    %v170 = vld [vmem:[#allocation2 + $0x48] sm:$0xff]
    %v171 = vld [vmem:[#allocation2 + $0x50] sm:$0xff]
    %v172 = vld [vmem:[#allocation2 + $0x58] sm:$0xff]
    %v173 = vld [vmem:[#allocation2 + $0x60] sm:$0xff]
    %v174 = vld [vmem:[#allocation2 + $0x68] sm:$0xff]
    %v175 = vld [vmem:[#allocation2 + $0x70] sm:$0xff]
    %v176 = vld [vmem:[#allocation2 + $0x78] sm:$0xff]
    %v177 = vld [vmem:[#allocation2 + $0x80] sm:$0xff]
    %v178 = vld [vmem:[#allocation2 + $0x88] sm:$0xff]
    %v179 = vld [vmem:[#allocation2 + $0x90] sm:$0xff]
    %v180 = vld [vmem:[#allocation2 + $0x98] sm:$0xff]
    %v181 = vld [vmem:[#allocation2 + $0xa0] sm:$0xff]
    %v182 = vld [vmem:[#allocation2 + $0xa8] sm:$0xff]
    %v183 = vld [vmem:[#allocation2 + $0xb0] sm:$0xff]
    %v184 = vld [vmem:[#allocation2 + $0xb8] sm:$0xff]
    %v185 = vld [vmem:[#allocation2 + $0xc0] sm:$0xff]
    %v186 = vld [vmem:[#allocation2 + $0xc8] sm:$0xff]
    %v187 = vld [vmem:[#allocation2 + $0xd0] sm:$0xff]
    %v188 = vld [vmem:[#allocation2 + $0xd8] sm:$0xff]
    %v189 = vld [vmem:[#allocation2 + $0xe0] sm:$0xff]
    %v190 = vld [vmem:[#allocation2 + $0xe8] sm:$0xff]
    %v191 = vld [vmem:[#allocation2 + $0xf0] sm:$0xff]
    %v192 = vld [vmem:[#allocation2 + $0xf8] sm:$0xff]
    %v193 = vld [vmem:[#allocation2 + $0x100] sm:$0xff]
    %v194 = vld [vmem:[#allocation2 + $0x108] sm:$0xff]
    %v195 = vld [vmem:[#allocation2 + $0x110] sm:$0xff]
    %v196 = vld [vmem:[#allocation2 + $0x118] sm:$0xff]
    %v197 = vld [vmem:[#allocation2 + $0x120] sm:$0xff]
    %v198 = vld [vmem:[#allocation2 + $0x128] sm:$0xff]
    %v199 = vld [vmem:[#allocation2 + $0x130] sm:$0xff]
    %v200 = vld [vmem:[#allocation2 + $0x138] sm:$0xff]
    %v201 = vld [vmem:[#allocation2 + $0x140] sm:$0xff]
    %v202 = vld [vmem:[#allocation2 + $0x148] sm:$0xff]
    %v203 = vld [vmem:[#allocation2 + $0x150] sm:$0xff]
    %v204 = vld [vmem:[#allocation2 + $0x158] sm:$0xff]
    %v205 = vld [vmem:[#allocation2 + $0x160] sm:$0xff]
    %v206 = vld [vmem:[#allocation2 + $0x168] sm:$0xff]
    %v207 = vld [vmem:[#allocation2 + $0x170] sm:$0xff]
    %v208 = vld [vmem:[#allocation2 + $0x178] sm:$0xff]
    %v209 = vld [vmem:[#allocation2 + $0x180] sm:$0xff]
    %v210 = vld [vmem:[#allocation2 + $0x188] sm:$0xff]
    %v211 = vld [vmem:[#allocation2 + $0x190] sm:$0xff]
    %v212 = vld [vmem:[#allocation2 + $0x198] sm:$0xff]
    %v213 = vld [vmem:[#allocation2 + $0x1a0] sm:$0xff]
    %v214 = vld [vmem:[#allocation2 + $0x1a8] sm:$0xff]
    %v215 = vld [vmem:[#allocation2 + $0x1b0] sm:$0xff]
    %v216 = vld [vmem:[#allocation2 + $0x1b8] sm:$0xff]
    %v217 = vld [vmem:[#allocation2 + $0x1c0] sm:$0xff]
    %v218 = vld [vmem:[#allocation2 + $0x1c8] sm:$0xff]
    %v219 = vld [vmem:[#allocation2 + $0x1d0] sm:$0xff]
    %v220 = vld [vmem:[#allocation2 + $0x1d8] sm:$0xff]
    %v221 = vld [vmem:[#allocation2 + $0x1e0] sm:$0xff]
    %v222 = vld [vmem:[#allocation2 + $0x1e8] sm:$0xff]
    %v223 = vld [vmem:[#allocation2 + $0x1f0] sm:$0xff]
    %v224 = vld [vmem:[#allocation2 + $0x1f8] sm:$0xff]
    %v225 = vld [vmem:[%s4] sm:$0x3]
    %v227 = vlaneseq
    %v228 = vshrl.u32 %v227, 7
    %v229 = vsub.s32 0, %v228
    %v230 = vrot.slane %v225, %v229
    %v231 = vlaneseq
    %v232 = vshrl.u32 %v231, 7
    %v233 = vsub.s32 1, %v232
    %v234 = vrot.slane %v225, %v233
    %237 = vmatprep.subr.mxu0 %v192
    %238 = vmatpush1.msra.mxu0 %v191
    %239 = vmatprep.subr.mxu0 %v190
    %240 = vmatpush1.msra.mxu0 %v189
    %241 = vmatprep.subr.mxu0 %v188
    %242 = vmatpush1.msra.mxu0 %v187
    %243 = vmatprep.subr.mxu0 %v186
    %244 = vmatpush1.msra.mxu0 %v185
    %245 = vmatprep.subr.mxu0 %v184
    %246 = vmatpush1.msra.mxu0 %v183
    %247 = vmatprep.subr.mxu0 %v182
    %248 = vmatpush1.msra.mxu0 %v181
    %249 = vmatprep.subr.mxu0 %v180
    %250 = vmatpush1.msra.mxu0 %v179
    %251 = vmatprep.subr.mxu0 %v178
    %252 = vmatpush1.msra.mxu0 %v177
    %253 = vmatprep.subr.mxu0 %v176
    %254 = vmatpush1.msra.mxu0 %v175
    %255 = vmatprep.subr.mxu0 %v174
    %256 = vmatpush1.msra.mxu0 %v173
    %257 = vmatprep.subr.mxu0 %v172
    %258 = vmatpush1.msra.mxu0 %v171
    %259 = vmatprep.subr.mxu0 %v170
    %260 = vmatpush1.msra.mxu0 %v169
    %261 = vmatprep.subr.mxu0 %v168
    %262 = vmatpush1.msra.mxu0 %v167
    %263 = vmatprep.subr.mxu0 %v166
    %264 = vmatpush1.msra.mxu0 %v165
    %265 = vmatprep.subr.mxu0 %v164
    %266 = vmatpush1.msra.mxu0 %v163
    %267 = vmatprep.subr.mxu0 %v162
    %268 = vmatpush1.msra.mxu0 %v161
    %269 = vmatprep.subr.mxu0 %v224
    %270 = vmatpush2.msra.mxu0 %v223
    %271 = vmatprep.subr.mxu0 %v222
    %272 = vmatpush2.msra.mxu0 %v221
    %273 = vmatprep.subr.mxu0 %v220
    %274 = vmatpush2.msra.mxu0 %v219
    %275 = vmatprep.subr.mxu0 %v218
    %276 = vmatpush2.msra.mxu0 %v217
    %277 = vmatprep.subr.mxu0 %v216
    %278 = vmatpush2.msra.mxu0 %v215
    %279 = vmatprep.subr.mxu0 %v214
    %280 = vmatpush2.msra.mxu0 %v213
    %281 = vmatprep.subr.mxu0 %v212
    %282 = vmatpush2.msra.mxu0 %v211
    %283 = vmatprep.subr.mxu0 %v210
    %284 = vmatpush2.msra.mxu0 %v209
    %285 = vmatprep.subr.mxu0 %v208
    %286 = vmatpush2.msra.mxu0 %v207
    %287 = vmatprep.subr.mxu0 %v206
    %288 = vmatpush2.msra.mxu0 %v205
    %289 = vmatprep.subr.mxu0 %v204
    %290 = vmatpush2.msra.mxu0 %v203
    %291 = vmatprep.subr.mxu0 %v202
    %292 = vmatpush2.msra.mxu0 %v201
    %293 = vmatprep.subr.mxu0 %v200
    %294 = vmatpush2.msra.mxu0 %v199
    %295 = vmatprep.subr.mxu0 %v198
    %296 = vmatpush2.msra.mxu0 %v197
    %297 = vmatprep.subr.mxu0 %v196
    %298 = vmatpush2.msra.mxu0 %v195
    %299 = vmatprep.subr.mxu0 %v194
    %300 = vmatpush2.msra.mxu0 %v193
    %301 = vmatprep.mubr.f32.mxu0 %v160
    %302 = vmatmul.mubr.f32.gmra.mxu0 %v159
    %v303 = vpop.f32.mrf.mxu0
    %v304 = vadd.f32 %v230, %v303
    %v305 = vpop.f32.mrf.mxu0
    %v306 = vadd.f32 %v234, %v305
    %307 = vdwg.mxu0
    %v308 = vtanh.pop %v304
    %v309 = vtanh.pop %v306
    %v310 = vld [vmem:[#allocation5] sm:$0xff]
    %v311 = vld [vmem:[#allocation5 + $0x8] sm:$0xff]
    %v312 = vld [vmem:[#allocation5 + $0x10] sm:$0xff]
    %v313 = vld [vmem:[#allocation5 + $0x18] sm:$0xff]
    %v314 = vld [vmem:[#allocation5 + $0x20] sm:$0xff]
    %v315 = vld [vmem:[#allocation5 + $0x28] sm:$0xff]
    %v316 = vld [vmem:[#allocation5 + $0x30] sm:$0xff]
    %v317 = vld [vmem:[#allocation5 + $0x38] sm:$0xff]
    %v318 = vld [vmem:[#allocation5 + $0x40] sm:$0xff]
    %v319 = vld [vmem:[#allocation5 + $0x48] sm:$0xff]
    %v320 = vld [vmem:[#allocation5 + $0x50] sm:$0xff]
    %v321 = vld [vmem:[#allocation5 + $0x58] sm:$0xff]
    %v322 = vld [vmem:[#allocation5 + $0x60] sm:$0xff]
    %v323 = vld [vmem:[#allocation5 + $0x68] sm:$0xff]
    %v324 = vld [vmem:[#allocation5 + $0x70] sm:$0xff]
    %v325 = vld [vmem:[#allocation5 + $0x78] sm:$0xff]
    %v326 = vld [vmem:[#allocation5 + $0x80] sm:$0xff]
    %v327 = vld [vmem:[#allocation5 + $0x88] sm:$0xff]
    %v328 = vld [vmem:[#allocation5 + $0x90] sm:$0xff]
    %v329 = vld [vmem:[#allocation5 + $0x98] sm:$0xff]
    %v330 = vld [vmem:[#allocation5 + $0xa0] sm:$0xff]
    %v331 = vld [vmem:[#allocation5 + $0xa8] sm:$0xff]
    %v332 = vld [vmem:[#allocation5 + $0xb0] sm:$0xff]
    %v333 = vld [vmem:[#allocation5 + $0xb8] sm:$0xff]
    %v334 = vld [vmem:[#allocation5 + $0xc0] sm:$0xff]
    %v335 = vld [vmem:[#allocation5 + $0xc8] sm:$0xff]
    %v336 = vld [vmem:[#allocation5 + $0xd0] sm:$0xff]
    %v337 = vld [vmem:[#allocation5 + $0xd8] sm:$0xff]
    %v338 = vld [vmem:[#allocation5 + $0xe0] sm:$0xff]
    %v339 = vld [vmem:[#allocation5 + $0xe8] sm:$0xff]
    %v340 = vld [vmem:[#allocation5 + $0xf0] sm:$0xff]
    %v341 = vld [vmem:[#allocation5 + $0xf8] sm:$0xff]
    %v342 = vld [vmem:[#allocation5 + $0x100] sm:$0xff]
    %v343 = vld [vmem:[#allocation5 + $0x108] sm:$0xff]
    %v344 = vld [vmem:[#allocation5 + $0x110] sm:$0xff]
    %v345 = vld [vmem:[#allocation5 + $0x118] sm:$0xff]
    %v346 = vld [vmem:[#allocation5 + $0x120] sm:$0xff]
    %v347 = vld [vmem:[#allocation5 + $0x128] sm:$0xff]
    %v348 = vld [vmem:[#allocation5 + $0x130] sm:$0xff]
    %v349 = vld [vmem:[#allocation5 + $0x138] sm:$0xff]
    %v350 = vld [vmem:[#allocation5 + $0x140] sm:$0xff]
    %v351 = vld [vmem:[#allocation5 + $0x148] sm:$0xff]
    %v352 = vld [vmem:[#allocation5 + $0x150] sm:$0xff]
    %v353 = vld [vmem:[#allocation5 + $0x158] sm:$0xff]
    %v354 = vld [vmem:[#allocation5 + $0x160] sm:$0xff]
    %v355 = vld [vmem:[#allocation5 + $0x168] sm:$0xff]
    %v356 = vld [vmem:[#allocation5 + $0x170] sm:$0xff]
    %v357 = vld [vmem:[#allocation5 + $0x178] sm:$0xff]
    %v358 = vld [vmem:[#allocation5 + $0x180] sm:$0xff]
    %v359 = vld [vmem:[#allocation5 + $0x188] sm:$0xff]
    %v360 = vld [vmem:[#allocation5 + $0x190] sm:$0xff]
    %v361 = vld [vmem:[#allocation5 + $0x198] sm:$0xff]
    %v362 = vld [vmem:[#allocation5 + $0x1a0] sm:$0xff]
    %v363 = vld [vmem:[#allocation5 + $0x1a8] sm:$0xff]
    %v364 = vld [vmem:[#allocation5 + $0x1b0] sm:$0xff]
    %v365 = vld [vmem:[#allocation5 + $0x1b8] sm:$0xff]
    %v366 = vld [vmem:[#allocation5 + $0x1c0] sm:$0xff]
    %v367 = vld [vmem:[#allocation5 + $0x1c8] sm:$0xff]
    %v368 = vld [vmem:[#allocation5 + $0x1d0] sm:$0xff]
    %v369 = vld [vmem:[#allocation5 + $0x1d8] sm:$0xff]
    %v370 = vld [vmem:[#allocation5 + $0x1e0] sm:$0xff]
    %v371 = vld [vmem:[#allocation5 + $0x1e8] sm:$0xff]
    %v372 = vld [vmem:[#allocation5 + $0x1f0] sm:$0xff]
    %v373 = vld [vmem:[#allocation5 + $0x1f8] sm:$0xff]
    %v374 = vld [vmem:[%s6] sm:$0x3]
    %v376 = vlaneseq
    %v377 = vshrl.u32 %v376, 7
    %v378 = vsub.s32 0, %v377
    %v379 = vrot.slane %v374, %v378
    %v380 = vlaneseq
    %v381 = vshrl.u32 %v380, 7
    %v382 = vsub.s32 1, %v381
    %v383 = vrot.slane %v374, %v382
    %386 = vmatprep.subr.mxu0 %v341
    %387 = vmatpush1.msra.mxu0 %v340
    %388 = vmatprep.subr.mxu0 %v339
    %389 = vmatpush1.msra.mxu0 %v338
    %390 = vmatprep.subr.mxu0 %v337
    %391 = vmatpush1.msra.mxu0 %v336
    %392 = vmatprep.subr.mxu0 %v335
    %393 = vmatpush1.msra.mxu0 %v334
    %394 = vmatprep.subr.mxu0 %v333
    %395 = vmatpush1.msra.mxu0 %v332
    %396 = vmatprep.subr.mxu0 %v331
    %397 = vmatpush1.msra.mxu0 %v330
    %398 = vmatprep.subr.mxu0 %v329
    %399 = vmatpush1.msra.mxu0 %v328
    %400 = vmatprep.subr.mxu0 %v327
    %401 = vmatpush1.msra.mxu0 %v326
    %402 = vmatprep.subr.mxu0 %v325
    %403 = vmatpush1.msra.mxu0 %v324
    %404 = vmatprep.subr.mxu0 %v323
    %405 = vmatpush1.msra.mxu0 %v322
    %406 = vmatprep.subr.mxu0 %v321
    %407 = vmatpush1.msra.mxu0 %v320
    %408 = vmatprep.subr.mxu0 %v319
    %409 = vmatpush1.msra.mxu0 %v318
    %410 = vmatprep.subr.mxu0 %v317
    %411 = vmatpush1.msra.mxu0 %v316
    %412 = vmatprep.subr.mxu0 %v315
    %413 = vmatpush1.msra.mxu0 %v314
    %414 = vmatprep.subr.mxu0 %v313
    %415 = vmatpush1.msra.mxu0 %v312
    %416 = vmatprep.subr.mxu0 %v311
    %417 = vmatpush1.msra.mxu0 %v310
    %418 = vmatprep.subr.mxu0 %v373
    %419 = vmatpush2.msra.mxu0 %v372
    %420 = vmatprep.subr.mxu0 %v371
    %421 = vmatpush2.msra.mxu0 %v370
    %422 = vmatprep.subr.mxu0 %v369
    %423 = vmatpush2.msra.mxu0 %v368
    %424 = vmatprep.subr.mxu0 %v367
    %425 = vmatpush2.msra.mxu0 %v366
    %426 = vmatprep.subr.mxu0 %v365
    %427 = vmatpush2.msra.mxu0 %v364
    %428 = vmatprep.subr.mxu0 %v363
    %429 = vmatpush2.msra.mxu0 %v362
    %430 = vmatprep.subr.mxu0 %v361
    %431 = vmatpush2.msra.mxu0 %v360
    %432 = vmatprep.subr.mxu0 %v359
    %433 = vmatpush2.msra.mxu0 %v358
    %434 = vmatprep.subr.mxu0 %v357
    %435 = vmatpush2.msra.mxu0 %v356
    %436 = vmatprep.subr.mxu0 %v355
    %437 = vmatpush2.msra.mxu0 %v354
    %438 = vmatprep.subr.mxu0 %v353
    %439 = vmatpush2.msra.mxu0 %v352
    %440 = vmatprep.subr.mxu0 %v351
    %441 = vmatpush2.msra.mxu0 %v350
    %442 = vmatprep.subr.mxu0 %v349
    %443 = vmatpush2.msra.mxu0 %v348
    %444 = vmatprep.subr.mxu0 %v347
    %445 = vmatpush2.msra.mxu0 %v346
    %446 = vmatprep.subr.mxu0 %v345
    %447 = vmatpush2.msra.mxu0 %v344
    %448 = vmatprep.subr.mxu0 %v343
    %449 = vmatpush2.msra.mxu0 %v342
    %450 = vmatprep.mubr.f32.mxu0 %v309
    %451 = vmatmul.mubr.f32.gmra.mxu0 %v308
    %v452 = vpop.f32.mrf.mxu0
    %v453 = vadd.f32 %v379, %v452
    %v454 = vpop.f32.mrf.mxu0
    %v455 = vadd.f32 %v383, %v454
    %456 = vdwg.mxu0
    %v457 = vtanh.pop %v453
    %v458 = vtanh.pop %v455
    %v459 = vld [vmem:[%s7] sm:$0xff]
    %v460 = vld [vmem:[%s7 + $0x8] sm:$0xff]
    %v461 = vld [vmem:[%s7 + $0x10] sm:$0xff]
    %v462 = vld [vmem:[%s7 + $0x18] sm:$0xff]
    %v463 = vld [vmem:[%s7 + $0x20] sm:$0xff]
    %v464 = vld [vmem:[%s7 + $0x28] sm:$0xff]
    %v465 = vld [vmem:[%s7 + $0x30] sm:$0xff]
    %v466 = vld [vmem:[%s7 + $0x38] sm:$0xff]
    %v467 = vld [vmem:[%s7 + $0x40] sm:$0xff]
    %v468 = vld [vmem:[%s7 + $0x48] sm:$0xff]
    %v469 = vld [vmem:[%s7 + $0x50] sm:$0xff]
    %v470 = vld [vmem:[%s7 + $0x58] sm:$0xff]
    %v471 = vld [vmem:[%s7 + $0x60] sm:$0xff]
    %v472 = vld [vmem:[%s7 + $0x68] sm:$0xff]
    %v473 = vld [vmem:[%s7 + $0x70] sm:$0xff]
    %v474 = vld [vmem:[%s7 + $0x78] sm:$0xff]
    %v475 = vld [vmem:[%s7 + $0x80] sm:$0xff]
    %v476 = vld [vmem:[%s7 + $0x88] sm:$0xff]
    %v477 = vld [vmem:[%s7 + $0x90] sm:$0xff]
    %v478 = vld [vmem:[%s7 + $0x98] sm:$0xff]
    %v479 = vld [vmem:[%s7 + $0xa0] sm:$0xff]
    %v480 = vld [vmem:[%s7 + $0xa8] sm:$0xff]
    %v481 = vld [vmem:[%s7 + $0xb0] sm:$0xff]
    %v482 = vld [vmem:[%s7 + $0xb8] sm:$0xff]
    %v483 = vld [vmem:[%s7 + $0xc0] sm:$0xff]
    %v484 = vld [vmem:[%s7 + $0xc8] sm:$0xff]
    %v485 = vld [vmem:[%s7 + $0xd0] sm:$0xff]
    %v486 = vld [vmem:[%s7 + $0xd8] sm:$0xff]
    %v487 = vld [vmem:[%s7 + $0xe0] sm:$0xff]
    %v488 = vld [vmem:[%s7 + $0xe8] sm:$0xff]
    %v489 = vld [vmem:[%s7 + $0xf0] sm:$0xff]
    %v490 = vld [vmem:[%s7 + $0xf8] sm:$0xff]
    %v491 = vld [vmem:[%s8] sm:$0x1]
    %v493 = vlaneseq
    %v494 = vshrl.u32 %v493, 7
    %v495 = vsub.s32 0, %v494
    %v496 = vrot.slane %v491, %v495
    %498 = vmatprep.subr.mxu0 0.0
    %499 = vmatpush1.msra.mxu0 %v474
    %500 = vmatprep.subr.mxu0 0.0
    %501 = vmatpush1.msra.mxu0 %v473
    %502 = vmatprep.subr.mxu0 0.0
    %503 = vmatpush1.msra.mxu0 %v472
    %504 = vmatprep.subr.mxu0 0.0
    %505 = vmatpush1.msra.mxu0 %v471
    %506 = vmatprep.subr.mxu0 0.0
    %507 = vmatpush1.msra.mxu0 %v470
    %508 = vmatprep.subr.mxu0 0.0
    %509 = vmatpush1.msra.mxu0 %v469
    %510 = vmatprep.subr.mxu0 0.0
    %511 = vmatpush1.msra.mxu0 %v468
    %512 = vmatprep.subr.mxu0 0.0
    %513 = vmatpush1.msra.mxu0 %v467
    %514 = vmatprep.subr.mxu0 0.0
    %515 = vmatpush1.msra.mxu0 %v466
    %516 = vmatprep.subr.mxu0 0.0
    %517 = vmatpush1.msra.mxu0 %v465
    %518 = vmatprep.subr.mxu0 0.0
    %519 = vmatpush1.msra.mxu0 %v464
    %520 = vmatprep.subr.mxu0 0.0
    %521 = vmatpush1.msra.mxu0 %v463
    %522 = vmatprep.subr.mxu0 0.0
    %523 = vmatpush1.msra.mxu0 %v462
    %524 = vmatprep.subr.mxu0 0.0
    %525 = vmatpush1.msra.mxu0 %v461
    %526 = vmatprep.subr.mxu0 0.0
    %527 = vmatpush1.msra.mxu0 %v460
    %528 = vmatprep.subr.mxu0 0.0
    %529 = vmatpush1.msra.mxu0 %v459
    %530 = vmatprep.subr.mxu0 0.0
    %531 = vmatpush2.msra.mxu0 %v490
    %532 = vmatprep.subr.mxu0 0.0
    %533 = vmatpush2.msra.mxu0 %v489
    %534 = vmatprep.subr.mxu0 0.0
    %535 = vmatpush2.msra.mxu0 %v488
    %536 = vmatprep.subr.mxu0 0.0
    %537 = vmatpush2.msra.mxu0 %v487
    %538 = vmatprep.subr.mxu0 0.0
    %539 = vmatpush2.msra.mxu0 %v486
    %540 = vmatprep.subr.mxu0 0.0
    %541 = vmatpush2.msra.mxu0 %v485
    %542 = vmatprep.subr.mxu0 0.0
    %543 = vmatpush2.msra.mxu0 %v484
    %544 = vmatprep.subr.mxu0 0.0
    %545 = vmatpush2.msra.mxu0 %v483
    %546 = vmatprep.subr.mxu0 0.0
    %547 = vmatpush2.msra.mxu0 %v482
    %548 = vmatprep.subr.mxu0 0.0
    %549 = vmatpush2.msra.mxu0 %v481
    %550 = vmatprep.subr.mxu0 0.0
    %551 = vmatpush2.msra.mxu0 %v480
    %552 = vmatprep.subr.mxu0 0.0
    %553 = vmatpush2.msra.mxu0 %v479
    %554 = vmatprep.subr.mxu0 0.0
    %555 = vmatpush2.msra.mxu0 %v478
    %556 = vmatprep.subr.mxu0 0.0
    %557 = vmatpush2.msra.mxu0 %v477
    %558 = vmatprep.subr.mxu0 0.0
    %559 = vmatpush2.msra.mxu0 %v476
    %560 = vmatprep.subr.mxu0 0.0
    %561 = vmatpush2.msra.mxu0 %v475
    %562 = vmatprep.mubr.f32.mxu0 %v458
    %563 = vmatmul.mubr.f32.gmra.mxu0 %v457
    %v564 = vpop.f32.mrf.mxu0
    %v565 = vadd.f32 %v496, %v564
    %v566 = vpop.f32.mrf.mxu0
    %567 = vdwg.mxu0
    %v568 = vtanh.pop %v565
    %v569 = vld [vmem:[%s9] sm:$0xff]
    %v570 = vld [vmem:[%s9 + $0x8] sm:$0xff]
    %v571 = vld [vmem:[%s9 + $0x10] sm:$0xff]
    %v572 = vld [vmem:[%s9 + $0x18] sm:$0xff]
    %v573 = vld [vmem:[%s9 + $0x20] sm:$0xff]
    %v574 = vld [vmem:[%s9 + $0x28] sm:$0xff]
    %v575 = vld [vmem:[%s9 + $0x30] sm:$0xff]
    %v576 = vld [vmem:[%s9 + $0x38] sm:$0xff]
    %v577 = vld [vmem:[%s10] sm:$0x1]
    %v579 = vlaneseq
    %v580 = vshrl.u32 %v579, 7
    %v581 = vsub.s32 0, %v580
    %v582 = vrot.slane %v577, %v581
    %vm584 = vcmask 523264
    %v586 = vsel %vm584, %v568, 0
    %588 = vmatprep.subr.mxu0 0.0
    %589 = vmatpush1.msra.mxu0 0.0
    %590 = vmatprep.subr.mxu0 0.0
    %591 = vmatpush1.msra.mxu0 0.0
    %592 = vmatprep.subr.mxu0 0.0
    %593 = vmatpush1.msra.mxu0 0.0
    %594 = vmatprep.subr.mxu0 0.0
    %595 = vmatpush1.msra.mxu0 0.0
    %596 = vmatprep.subr.mxu0 0.0
    %597 = vmatpush1.msra.mxu0 0.0
    %598 = vmatprep.subr.mxu0 0.0
    %599 = vmatpush1.msra.mxu0 0.0
    %600 = vmatprep.subr.mxu0 0.0
    %601 = vmatpush1.msra.mxu0 0.0
    %602 = vmatprep.subr.mxu0 0.0
    %603 = vmatpush1.msra.mxu0 0.0
    %604 = vmatprep.subr.mxu0 0.0
    %605 = vmatpush1.msra.mxu0 %v576
    %606 = vmatprep.subr.mxu0 0.0
    %607 = vmatpush1.msra.mxu0 %v575
    %608 = vmatprep.subr.mxu0 0.0
    %609 = vmatpush1.msra.mxu0 %v574
    %610 = vmatprep.subr.mxu0 0.0
    %611 = vmatpush1.msra.mxu0 %v573
    %612 = vmatprep.subr.mxu0 0.0
    %613 = vmatpush1.msra.mxu0 %v572
    %614 = vmatprep.subr.mxu0 0.0
    %615 = vmatpush1.msra.mxu0 %v571
    %616 = vmatprep.subr.mxu0 0.0
    %617 = vmatpush1.msra.mxu0 %v570
    %618 = vmatprep.subr.mxu0 0.0
    %619 = vmatpush1.msra.mxu0 %v569
    %620 = vmatprep.subr.mxu0 0.0
    %621 = vmatpush2.msra.mxu0 0.0
    %622 = vmatprep.subr.mxu0 0.0
    %623 = vmatpush2.msra.mxu0 0.0
    %624 = vmatprep.subr.mxu0 0.0
    %625 = vmatpush2.msra.mxu0 0.0
    %626 = vmatprep.subr.mxu0 0.0
    %627 = vmatpush2.msra.mxu0 0.0
    %628 = vmatprep.subr.mxu0 0.0
    %629 = vmatpush2.msra.mxu0 0.0
    %630 = vmatprep.subr.mxu0 0.0
    %631 = vmatpush2.msra.mxu0 0.0
    %632 = vmatprep.subr.mxu0 0.0
    %633 = vmatpush2.msra.mxu0 0.0
    %634 = vmatprep.subr.mxu0 0.0
    %635 = vmatpush2.msra.mxu0 0.0
    %636 = vmatprep.subr.mxu0 0.0
    %637 = vmatpush2.msra.mxu0 0.0
    %638 = vmatprep.subr.mxu0 0.0
    %639 = vmatpush2.msra.mxu0 0.0
    %640 = vmatprep.subr.mxu0 0.0
    %641 = vmatpush2.msra.mxu0 0.0
    %642 = vmatprep.subr.mxu0 0.0
    %643 = vmatpush2.msra.mxu0 0.0
    %644 = vmatprep.subr.mxu0 0.0
    %645 = vmatpush2.msra.mxu0 0.0
    %646 = vmatprep.subr.mxu0 0.0
    %647 = vmatpush2.msra.mxu0 0.0
    %648 = vmatprep.subr.mxu0 0.0
    %649 = vmatpush2.msra.mxu0 0.0
    %650 = vmatprep.subr.mxu0 0.0
    %651 = vmatpush2.msra.mxu0 0.0
    %652 = vmatprep.mubr.f32.mxu0 0.0
    %653 = vmatmul.mubr.f32.gmra.mxu0 %v586
    %v654 = vpop.f32.mrf.mxu0
    %v655 = vadd.f32 %v582, %v654
    %v656 = vpop.f32.mrf.mxu0
    %657 = vdwg.mxu0
    %658 = vmax.xlane.f32.xlu0 %v655
    %v659 = vpop.xlane.xlu0 %658
    %v660 = vsub.f32 %v655, %v659
    %v661 = vmul.f32 %v660, 1.442695
    %v662 = vpow.pop %v661
    %663 = vadd.xlane.f32.xlu0 %v662
    %v664 = vpop.xlane.xlu0 %663
    %v665 = vrcp.pop %v664
    %v666 = vmul.f32 %v662, %v665
    %667 = vst [vmem:[#allocation7] sm:$0xff] %v666
    // Predicated region
    $region54: #{tpu_custom_call.1} parent=1 // pred_check
      _
    $region55: #{tpu_custom_call.1} parent=1 // pred_check_branch
      %669 = sbr.rel (0) target = $region57
    $region56: #{tpu_custom_call.1} parent=1 // pred_region
      %s671 = ssub.s32 128, 128
      %672 = vsyncadd [#allocation4], %s671
      %s674 = sshll.u32 [#allocation7], 4
      %s675 = int_to_ptr.vmem [resolvable:$true] %s674
      %677 = dma.vmem_to_hbm [thread:$0]  %s675, 128, %s11, [#allocation4]
    $region57: #{tpu_custom_call.1} parent=1 // pred_fallthru
      _
    // Predicated region
    $region58: #{tpu_custom_call.1} parent=1 // pred_check
      _
    $region59: #{tpu_custom_call.1} parent=1 // pred_check_branch
      %679 = sbr.rel (0) target = $region61
    $region60: #{tpu_custom_call.1} parent=1 // pred_region
      %680 = dma.done [#allocation4], 128
    $region61: #{tpu_custom_call.1} parent=1 // pred_fallthru
      _
    %681 = vsyncpa [#allocation3], 1
    %682 = vsyncpa [#allocation6], 1
    %683 = vsyncpa [#allocation4], 1

</llo_original>
